<compile_context>
chip_gen: v6e
topology: v6e:2x2x1
jax: 0.10.0
libtpu: 0.0.40
codegen_flags: <defaults>
</compile_context>

<pallas_src>
import functools

import jax
import jax.numpy as jnp
from jax.experimental import pallas as pl
from jax.experimental.pallas import tpu as pltpu


IN_FEATURE = 256     # effective input to the (final) layer1 pipeline
HIDDEN = 128
OUT_PAD = 128        # lane-dense padded output width


def _mlp_kernel(x_ref, w1_ref, b1_ref, w2_ref, b2_ref, o_ref):
    # Fused: Linear(256->128) -> ReLU -> Linear(128->out_pad)
    # MXU matmuls in bf16, f32 accumulation; bias/ReLU in f32 on the VPU.
    h = jnp.dot(x_ref[...], w1_ref[...], preferred_element_type=jnp.float32)
    h = jnp.maximum(h + b1_ref[...], 0.0)                  # (TB, 128) f32
    y = jnp.dot(h.astype(jnp.bfloat16), w2_ref[...],
                preferred_element_type=jnp.float32)
    o_ref[...] = (y + b2_ref[...]).astype(o_ref.dtype)     # (TB, 128)


@functools.partial(jax.jit, static_argnames=("tb",))
def linear_net_forward(x, w1, b1, w2, b2, *, tb=256):
    """x: (B, 256) f32; weights stored as (in_features, out_features).

    Returns (B, out_feature) f32, where out_feature = w2.shape[1].
    """
    B = x.shape[0]
    out_feature = w2.shape[1]

    # --- layout plumbing (outside the kernel) ---------------------------
    # Pad batch to a multiple of TB so every grid block is full.
    n_blocks = pl.cdiv(B, tb)
    b_pad = n_blocks * tb
    x_p = jnp.pad(x, ((0, b_pad - B), (0, 0))) if b_pad != B else x
    x_bf = x_p.astype(jnp.bfloat16)                        # halves x DMA bytes

    # bf16 weights for the MXU; pad the narrow output dim to 128 lanes.
    w1_bf = w1.astype(jnp.bfloat16)                        # (256, 128)
    w2_pad = jnp.pad(w2, ((0, 0), (0, OUT_PAD - out_feature)))
    w2_bf = w2_pad.astype(jnp.bfloat16)                    # (128, 128)

    b1_2d = b1.astype(jnp.float32).reshape(1, HIDDEN)      # (1, 128)
    b2_2d = jnp.pad(b2.astype(jnp.float32),
                    (0, OUT_PAD - out_feature)).reshape(1, OUT_PAD)

    y_pad = pl.pallas_call(
        _mlp_kernel,
        out_shape=jax.ShapeDtypeStruct((b_pad, OUT_PAD), jnp.float32),
        grid=(n_blocks,),
        in_specs=[
            # x: streamed per batch block (double-buffered by the pipeline).
            pl.BlockSpec((tb, IN_FEATURE), lambda i: (i, 0)),
            # Weights / biases: constant index_map -> VMEM-resident.
            pl.BlockSpec((IN_FEATURE, HIDDEN), lambda i: (0, 0)),
            pl.BlockSpec((1, HIDDEN), lambda i: (0, 0)),
            pl.BlockSpec((HIDDEN, OUT_PAD), lambda i: (0, 0)),
            pl.BlockSpec((1, OUT_PAD), lambda i: (0, 0)),
        ],
        out_specs=pl.BlockSpec((tb, OUT_PAD), lambda i: (i, 0)),
        compiler_params=pltpu.CompilerParams(
            dimension_semantics=("parallel",)),
    )(x_bf, w1_bf, b1_2d, w2_bf, b2_2d)

    # Slice off batch padding and the padded output lanes.
    return y_pad[:B, :out_feature]


def init_params(key, out_feature=64, dtype=jnp.float32):
    """Deterministic PyTorch-Linear-style init (uniform +-1/sqrt(fan_in))."""
    k1, k2, k3, k4 = jax.random.split(key, 4)
    bound1 = 1.0 / (IN_FEATURE ** 0.5)
    bound2 = 1.0 / (HIDDEN ** 0.5)
    # stored as (in_features, out_features) == transpose of PyTorch weight
    w1 = jax.random.uniform(k1, (IN_FEATURE, HIDDEN), dtype, -bound1, bound1)
    b1 = jax.random.uniform(k2, (HIDDEN,), dtype, -bound1, bound1)
    w2 = jax.random.uniform(k3, (HIDDEN, out_feature), dtype, -bound2, bound2)
    b2 = jax.random.uniform(k4, (out_feature,), dtype, -bound2, bound2)
    return w1, b1, w2, b2


if __name__ == "__main__":
    key = jax.random.PRNGKey(0)
    k_x, k_p = jax.random.split(key)

    B = 512               # 2 grid blocks of TB=256 (MXU-feeding tile height)
    out_feature = 64

    x = jax.random.normal(k_x, (B, IN_FEATURE), jnp.float32)
    w1, b1, w2, b2 = init_params(k_p, out_feature=out_feature)

    y = linear_net_forward(x, w1, b1, w2, b2, tb=256)
    y = jax.block_until_ready(y)

    # Precision-matched plain-JAX reference (same bf16 MXU / f32-accumulate
    # casts as the kernel).
    h_ref = jnp.dot(x.astype(jnp.bfloat16), w1.astype(jnp.bfloat16),
                    preferred_element_type=jnp.float32)
    h_ref = jnp.maximum(h_ref + b1.astype(jnp.float32), 0.0)
    ref = jnp.dot(h_ref.astype(jnp.bfloat16), w2.astype(jnp.bfloat16),
                  preferred_element_type=jnp.float32) + b2.astype(jnp.float32)

    assert y.shape == (B, out_feature)
    assert jnp.allclose(y, ref, atol=1e-3, rtol=1e-3)

    print("KERNEL_OK")
</pallas_src>

<mosaic_0001>
module attributes {stable_mosaic.version = 11 : i64} {
  func.func @_mlp_kernel(%arg0: i32, %arg1: memref<256x256xbf16, #tpu.memory_space<vmem>>, %arg2: memref<256x128xbf16, #tpu.memory_space<vmem>>, %arg3: memref<1x128xf32, #tpu.memory_space<vmem>>, %arg4: memref<128x128xbf16, #tpu.memory_space<vmem>>, %arg5: memref<1x128xf32, #tpu.memory_space<vmem>>, %arg6: memref<256x128xf32, #tpu.memory_space<vmem>>) attributes {dimension_semantics = [#tpu.dimension_semantics<parallel>], iteration_bounds = array<i64: 2>, scalar_prefetch = 0 : i64, scratch_operands = 0 : i64, tpu.core_type = #tpu.core_type<tc>, window_params = [{transform_indices = @transform_0, window_bounds = array<i64: 256, 256>}, {pipeline_mode = #tpu.pipeline_mode<synchronous>, transform_indices = @transform_1, window_bounds = array<i64: 256, 128>}, {pipeline_mode = #tpu.pipeline_mode<synchronous>, transform_indices = @transform_2, window_bounds = array<i64: 1, 128>}, {pipeline_mode = #tpu.pipeline_mode<synchronous>, transform_indices = @transform_3, window_bounds = array<i64: 128, 128>}, {pipeline_mode = #tpu.pipeline_mode<synchronous>, transform_indices = @transform_4, window_bounds = array<i64: 1, 128>}, {transform_indices = @transform_5, window_bounds = array<i64: 256, 128>}]} {
    %c0 = arith.constant 0 : index
    %c0_0 = arith.constant 0 : index
    %0 = vector.load %arg1[%c0, %c0_0] : memref<256x256xbf16, #tpu.memory_space<vmem>>, vector<256x256xbf16>
    %c0_1 = arith.constant 0 : index
    %c0_2 = arith.constant 0 : index
    %1 = vector.load %arg2[%c0_1, %c0_2] : memref<256x128xbf16, #tpu.memory_space<vmem>>, vector<256x128xbf16>
    %cst = arith.constant dense<0.000000e+00> : vector<256x128xf32>
    %2 = tpu.matmul %0, %1, %cst {dimension_numbers = #tpu.dot_dimension_numbers<[1], [0], [0], [1], [0, 0, 1, 1], [], []>} : vector<256x256xbf16>, vector<256x128xbf16>, vector<256x128xf32> -> vector<256x128xf32>
    %c0_3 = arith.constant 0 : index
    %c0_4 = arith.constant 0 : index
    %3 = vector.load %arg3[%c0_3, %c0_4] : memref<1x128xf32, #tpu.memory_space<vmem>>, vector<1x128xf32>
    %4 = vector.broadcast %3 : vector<1x128xf32> to vector<256x128xf32>
    %5 = arith.addf %2, %4 : vector<256x128xf32>
    %cst_5 = arith.constant 0.000000e+00 : f32
    %6 = vector.broadcast %cst_5 : f32 to vector<256x128xf32>
    %7 = arith.maximumf %5, %6 : vector<256x128xf32>
    %8 = arith.truncf %7 : vector<256x128xf32> to vector<256x128xbf16>
    %c0_6 = arith.constant 0 : index
    %c0_7 = arith.constant 0 : index
    %9 = vector.load %arg4[%c0_6, %c0_7] : memref<128x128xbf16, #tpu.memory_space<vmem>>, vector<128x128xbf16>
    %cst_8 = arith.constant dense<0.000000e+00> : vector<256x128xf32>
    %10 = tpu.matmul %8, %9, %cst_8 {dimension_numbers = #tpu.dot_dimension_numbers<[1], [0], [0], [1], [0, 0, 1, 1], [], []>} : vector<256x128xbf16>, vector<128x128xbf16>, vector<256x128xf32> -> vector<256x128xf32>
    %c0_9 = arith.constant 0 : index
    %c0_10 = arith.constant 0 : index
    %11 = vector.load %arg5[%c0_9, %c0_10] : memref<1x128xf32, #tpu.memory_space<vmem>>, vector<1x128xf32>
    %12 = vector.broadcast %11 : vector<1x128xf32> to vector<256x128xf32>
    %13 = arith.addf %10, %12 : vector<256x128xf32>
    %c0_11 = arith.constant 0 : index
    %c0_12 = arith.constant 0 : index
    %14 = vector.load %arg6[%c0_11, %c0_12] : memref<256x128xf32, #tpu.memory_space<vmem>>, vector<256x128xf32>
    tpu.vector_store %arg6[%c0_11, %c0_12], %13 {strides = array<i32>} : memref<256x128xf32, #tpu.memory_space<vmem>>, vector<256x128xf32>,
    return
  }
  func.func @transform_0(%arg0: i32) -> (i32, i32) {
    %c0_i32 = arith.constant 0 : i32
    %c0_i32_0 = arith.constant 0 : i32
    return %arg0, %c0_i32 : i32, i32
  }
  func.func @transform_1(%arg0: i32) -> (i32, i32) {
    %c0_i32 = arith.constant 0 : i32
    %c0_i32_0 = arith.constant 0 : i32
    %c0_i32_1 = arith.constant 0 : i32
    return %c0_i32, %c0_i32_0 : i32, i32
  }
  func.func @transform_2(%arg0: i32) -> (i32, i32) {
    %c0_i32 = arith.constant 0 : i32
    %c0_i32_0 = arith.constant 0 : i32
    %c0_i32_1 = arith.constant 0 : i32
    return %c0_i32, %c0_i32_0 : i32, i32
  }
  func.func @transform_3(%arg0: i32) -> (i32, i32) {
    %c0_i32 = arith.constant 0 : i32
    %c0_i32_0 = arith.constant 0 : i32
    %c0_i32_1 = arith.constant 0 : i32
    return %c0_i32, %c0_i32_0 : i32, i32
  }
  func.func @transform_4(%arg0: i32) -> (i32, i32) {
    %c0_i32 = arith.constant 0 : i32
    %c0_i32_0 = arith.constant 0 : i32
    %c0_i32_1 = arith.constant 0 : i32
    return %c0_i32, %c0_i32_0 : i32, i32
  }
  func.func @transform_5(%arg0: i32) -> (i32, i32) {
    %c0_i32 = arith.constant 0 : i32
    %c0_i32_0 = arith.constant 0 : i32
    return %arg0, %c0_i32 : i32, i32
  }
}

</mosaic_0001>

<llo_original>
// kernel: linear_net_forward.1
$region0: #{linear_net_forward.1}
  #allocation0 [shape = 'u32[]', space=smem, size = 0x4, offset = 0x4, fixed_abs, tag = 'smem constant byte address 0x4 - core index']
  #allocation1 [shape = 'u32[144,128]{1,0:T(1,128)}', space=vmem, size = 0x12000, scoped, tag = 'internal scratch']
  %s0 = inlined_call_operand.vmem [shape: bf16[512,256], index: 0, kind: input, shape index: {}]
  %s1 = inlined_call_operand.vmem [shape: bf16[256,128], index: 1, kind: input, shape index: {}]
  %s2 = inlined_call_operand.vmem [shape: f32[1,128], index: 2, kind: input, shape index: {}]
  %s3 = inlined_call_operand.vmem [shape: bf16[128,128], index: 3, kind: input, shape index: {}]
  %s4 = inlined_call_operand.vmem [shape: f32[1,128], index: 4, kind: input, shape index: {}]
  %s5 = inlined_call_operand.vmem [shape: f32[512,128], index: 5, kind: output, shape index: {}]
  %s6 = sld [smem:[#allocation0]]
  $region53: #{linear_net_forward.1} parent=0
    _
  %s8 = ssub.s32 1, %s6
  %s9 = scalar_select 0, %s8, %s6
  loop: start=0, step=1, limit=4
  $region2: #{linear_net_forward.1} parent=0 // loop_pre_header
    _
  $region3: #{linear_net_forward.1} parent=0 // loop_header
    %s11 = sphi 0, %s15
    %p12 = scmp.ge.s32.totalorder %s11, 4
    %s21 = sphi 0, %s23
    %s24 = sphi 0, %s21
    %s25 = sphi 0, %s24
    %s41 = sphi 0, %s25
    %s45 = sphi 0, %s45
    %s47 = sphi 0, %s45
    %s48 = sphi 0, %s47
    %s62 = sphi 0, %s48
    %s66 = sphi 0, %s66
    %s68 = sphi 0, %s66
    %s69 = sphi 0, %s68
    %s83 = sphi 0, %s69
    %s87 = sphi 0, %s87
    %s89 = sphi 0, %s87
    %s90 = sphi 0, %s89
    %s104 = sphi 0, %s90
    %s108 = sphi 0, %s108
    %s110 = sphi 0, %s108
    %s111 = sphi 0, %s110
    %s125 = sphi 0, %s111
    %s131 = sphi 0, %s133
    %s134 = sphi 0, %s131
    %s135 = sphi 0, %s134
    %s151 = sphi 0, %s135
  $region4: #{linear_net_forward.1} parent=0 // loop_header_branch
    %14 = sbr.rel (%p12) target = $region8
  $region5: #{linear_net_forward.1} parent=0 // loop_body
    %s16 = ssub.s32 %s11, 1
    %s17 = ssub.s32 %s11, 2
    %s18 = sadd.s32 %s11, 1
    %s19 = ssub.s32 %s11, %s18
    %p20 = scmp.eq.s32.totalorder %s19, 0
    %s22 = sadd.s32 %s21, 1
    %s23 = scalar_select %p20, %s21, %s22
    %p26 = pneg %p20
    %p27 = scmp.eq.s32.totalorder %s11, 1
    %p28 = por %p26, %p27
    %p29 = scmp.ne.s32.totalorder %s21, %s24
    %p30 = scmp.eq.s32.totalorder %s11, 0
    %p31 = por %p29, %p30
    %p32 = scmp.ne.s32.totalorder %s21, %s24
    %p33 = scmp.eq.s32.totalorder %s16, 1
    %p34 = por %p32, %p33
    %p35 = scmp.ne.s32.totalorder %s24, %s25
    %p36 = scmp.eq.s32.totalorder %s16, 0
    %p37 = por %p35, %p36
    %p38 = scmp.ne.s32.totalorder %s24, %s25
    %p39 = scmp.eq.s32.totalorder %s17, 1
    %p40 = por %p38, %p39
    %p42 = scmp.ne.s32.totalorder %s25, %s41
    %p43 = scmp.eq.s32.totalorder %s17, 0
    %p44 = por %p42, %p43
    %s46 = sadd.s32 %s45, 1
    %p49 = scmp.eq.s32.totalorder %s11, 1
    %p50 = scmp.ne.s32.totalorder %s45, %s47
    %p51 = scmp.eq.s32.totalorder %s11, 0
    %p52 = por %p50, %p51
    %p53 = scmp.ne.s32.totalorder %s45, %s47
    %p54 = scmp.eq.s32.totalorder %s16, 1
    %p55 = por %p53, %p54
    %p56 = scmp.ne.s32.totalorder %s47, %s48
    %p57 = scmp.eq.s32.totalorder %s16, 0
    %p58 = por %p56, %p57
    %p59 = scmp.ne.s32.totalorder %s47, %s48
    %p60 = scmp.eq.s32.totalorder %s17, 1
    %p61 = por %p59, %p60
    %p63 = scmp.ne.s32.totalorder %s48, %s62
    %p64 = scmp.eq.s32.totalorder %s17, 0
    %p65 = por %p63, %p64
    %s67 = sadd.s32 %s66, 1
    %p70 = scmp.eq.s32.totalorder %s11, 1
    %p71 = scmp.ne.s32.totalorder %s66, %s68
    %p72 = scmp.eq.s32.totalorder %s11, 0
    %p73 = por %p71, %p72
    %p74 = scmp.ne.s32.totalorder %s66, %s68
    %p75 = scmp.eq.s32.totalorder %s16, 1
    %p76 = por %p74, %p75
    %p77 = scmp.ne.s32.totalorder %s68, %s69
    %p78 = scmp.eq.s32.totalorder %s16, 0
    %p79 = por %p77, %p78
    %p80 = scmp.ne.s32.totalorder %s68, %s69
    %p81 = scmp.eq.s32.totalorder %s17, 1
    %p82 = por %p80, %p81
    %p84 = scmp.ne.s32.totalorder %s69, %s83
    %p85 = scmp.eq.s32.totalorder %s17, 0
    %p86 = por %p84, %p85
    %s88 = sadd.s32 %s87, 1
    %p91 = scmp.eq.s32.totalorder %s11, 1
    %p92 = scmp.ne.s32.totalorder %s87, %s89
    %p93 = scmp.eq.s32.totalorder %s11, 0
    %p94 = por %p92, %p93
    %p95 = scmp.ne.s32.totalorder %s87, %s89
    %p96 = scmp.eq.s32.totalorder %s16, 1
    %p97 = por %p95, %p96
    %p98 = scmp.ne.s32.totalorder %s89, %s90
    %p99 = scmp.eq.s32.totalorder %s16, 0
    %p100 = por %p98, %p99
    %p101 = scmp.ne.s32.totalorder %s89, %s90
    %p102 = scmp.eq.s32.totalorder %s17, 1
    %p103 = por %p101, %p102
    %p105 = scmp.ne.s32.totalorder %s90, %s104
    %p106 = scmp.eq.s32.totalorder %s17, 0
    %p107 = por %p105, %p106
    %s109 = sadd.s32 %s108, 1
    %p112 = scmp.eq.s32.totalorder %s11, 1
    %p113 = scmp.ne.s32.totalorder %s108, %s110
    %p114 = scmp.eq.s32.totalorder %s11, 0
    %p115 = por %p113, %p114
    %p116 = scmp.ne.s32.totalorder %s108, %s110
    %p117 = scmp.eq.s32.totalorder %s16, 1
    %p118 = por %p116, %p117
    %p119 = scmp.ne.s32.totalorder %s110, %s111
    %p120 = scmp.eq.s32.totalorder %s16, 0
    %p121 = por %p119, %p120
    %p122 = scmp.ne.s32.totalorder %s110, %s111
    %p123 = scmp.eq.s32.totalorder %s17, 1
    %p124 = por %p122, %p123
    %p126 = scmp.ne.s32.totalorder %s111, %s125
    %p127 = scmp.eq.s32.totalorder %s17, 0
    %p128 = por %p126, %p127
    %s129 = ssub.s32 %s11, %s18
    %p130 = scmp.eq.s32.totalorder %s129, 0
    %s132 = sadd.s32 %s131, 1
    %s133 = scalar_select %p130, %s131, %s132
    %p136 = pneg %p130
    %p137 = scmp.eq.s32.totalorder %s11, 1
    %p138 = por %p136, %p137
    %p139 = scmp.ne.s32.totalorder %s131, %s134
    %p140 = scmp.eq.s32.totalorder %s11, 0
    %p141 = por %p139, %p140
    %p142 = scmp.ne.s32.totalorder %s131, %s134
    %p143 = scmp.eq.s32.totalorder %s16, 1
    %p144 = por %p142, %p143
    %p145 = scmp.ne.s32.totalorder %s134, %s135
    %p146 = scmp.eq.s32.totalorder %s16, 0
    %p147 = por %p145, %p146
    %p148 = scmp.ne.s32.totalorder %s134, %s135
    %p149 = scmp.eq.s32.totalorder %s17, 1
    %p150 = por %p148, %p149
    %p152 = scmp.ne.s32.totalorder %s135, %s151
    %p153 = scmp.eq.s32.totalorder %s17, 0
    %p154 = por %p152, %p153
    %p155 = scmp.le.s32.totalorder 1, %s11
    %p156 = scmp.lt.s32.totalorder %s11, 3
    %p157 = pnand %p155, %p156
    %p158 = pneg %p157
    // Predicated region
    $region9: #{linear_net_forward.1} parent=5 // pred_check
      _
    $region10: #{linear_net_forward.1} parent=5 // pred_check_branch
      %160 = sbr.rel (%p157) target = $region12
    $region11: #{linear_net_forward.1} parent=5 // pred_region
      %s161 = ssub.s32 %s11, 1
      // Predicated region
      $region13: #{linear_net_forward.1} parent=11 // pred_check
        %p162 = pneg %p58
      $region14: #{linear_net_forward.1} parent=11 // pred_check_branch
        %164 = sbr.rel (%p162) target = $region16
      $region15: #{linear_net_forward.1} parent=11 // pred_region
        _
      $region16: #{linear_net_forward.1} parent=11 // pred_fallthru
        _
      // Predicated region
      $region17: #{linear_net_forward.1} parent=11 // pred_check
        %p165 = pneg %p79
      $region18: #{linear_net_forward.1} parent=11 // pred_check_branch
        %167 = sbr.rel (%p165) target = $region20
      $region19: #{linear_net_forward.1} parent=11 // pred_region
        _
      $region20: #{linear_net_forward.1} parent=11 // pred_fallthru
        _
      // Predicated region
      $region21: #{linear_net_forward.1} parent=11 // pred_check
        %p168 = pneg %p100
      $region22: #{linear_net_forward.1} parent=11 // pred_check_branch
        %170 = sbr.rel (%p168) target = $region24
      $region23: #{linear_net_forward.1} parent=11 // pred_region
        _
      $region24: #{linear_net_forward.1} parent=11 // pred_fallthru
        _
      // Predicated region
      $region25: #{linear_net_forward.1} parent=11 // pred_check
        %p171 = pneg %p121
      $region26: #{linear_net_forward.1} parent=11 // pred_check_branch
        %173 = sbr.rel (%p171) target = $region28
      $region27: #{linear_net_forward.1} parent=11 // pred_region
        _
      $region28: #{linear_net_forward.1} parent=11 // pred_fallthru
        _
    $region12: #{linear_net_forward.1} parent=5 // pred_fallthru
      _
    %p174 = scmp.lt.s32.totalorder %s11, 2
    // Predicated region
    $region29: #{linear_net_forward.1} parent=5 // pred_check
      %p175 = pneg %p174
    $region30: #{linear_net_forward.1} parent=5 // pred_check_branch
      %177 = sbr.rel (%p175) target = $region32
    $region31: #{linear_net_forward.1} parent=5 // pred_region
      // Predicated region
      $region33: #{linear_net_forward.1} parent=31 // pred_check
        %p178 = pneg %p31
      $region34: #{linear_net_forward.1} parent=31 // pred_check_branch
        %180 = sbr.rel (%p178) target = $region36
      $region35: #{linear_net_forward.1} parent=31 // pred_region
        %s181 = smul.u32 32, %s11
        %p182 = scmp.lt.s32.totalorder %s181, 63
        %s183 = scalar_select %p182, %s181, 63
        %s184 = smul.addr %s183, 2
        %s185 = smul.addr %s184, 4
        %s186 = scalar_lea.vmem %s0, %s185
        %s187 = smul.u32 32, %s11
      $region36: #{linear_net_forward.1} parent=31 // pred_fallthru
        _
    $region32: #{linear_net_forward.1} parent=5 // pred_fallthru
      _
    %p188 = scmp.le.s32.totalorder 1, %s11
    %p189 = scmp.lt.s32.totalorder %s11, 3
    %p190 = pnand %p188, %p189
    %p191 = pneg %p190
    // Predicated region
    $region37: #{linear_net_forward.1} parent=5 // pred_check
      _
    $region38: #{linear_net_forward.1} parent=5 // pred_check_branch
      %193 = sbr.rel (%p190) target = $region40
    $region39: #{linear_net_forward.1} parent=5 // pred_region
      %s194 = ssub.s32 %s11, 1
      %s195 = smul.u32 32, %s16
      %p196 = scmp.lt.s32.totalorder %s195, 63
      %s197 = scalar_select %p196, %s195, 63
      %s198 = smul.addr %s197, 2
      %s199 = smul.addr %s198, 4
      %s200 = scalar_lea.vmem %s0, %s199
      %p201 = pneg %p37
      %p202 = pneg %p34
      %p203 = pneg %p58
      %p204 = pneg %p55
      %p205 = pneg %p79
      %p206 = pneg %p76
      %p207 = pneg %p100
      %p208 = pneg %p97
      %p209 = pneg %p121
      %p210 = pneg %p118
      %p211 = pneg %p147
      %p212 = pneg %p144
      %s213 = smul.u32 32, %s16
      %p214 = scmp.lt.s32.totalorder %s213, 63
      %s215 = scalar_select %p214, %s213, 63
      %s216 = smul.addr %s215, 8
      %s217 = scalar_lea.vmem %s5, %s216
      %s218 = smul.u32 32, %s16
      %p219 = scmp.lt.s32.totalorder %s218, 63
      %s220 = scalar_select %p219, %s218, 63
      %s221 = smul.addr %s220, 2
      %s222 = smul.addr %s221, 4
      %s223 = scalar_lea.vmem %s0, %s222
      %s224 = smul.u32 32, %s16
      %s225 = smul.u32 32, %s16
      %p226 = scmp.lt.s32.totalorder %s225, 63
      %s227 = scalar_select %p226, %s225, 63
      %s228 = smul.addr %s227, 8
      %s229 = scalar_lea.vmem %s5, %s228
      %s230 = smul.u32 32, %s16
      %v232 = vld [vmem:[%s223] sm:$0xff]
      %v233 = vld [vmem:[%s223 + $0x8] sm:$0xff]
      %v234 = vld [vmem:[%s223 + $0x10] sm:$0xff]
      %v235 = vld [vmem:[%s223 + $0x18] sm:$0xff]
      %v236 = vld [vmem:[%s223 + $0x20] sm:$0xff]
      %v237 = vld [vmem:[%s223 + $0x28] sm:$0xff]
      %v238 = vld [vmem:[%s223 + $0x30] sm:$0xff]
      %v239 = vld [vmem:[%s223 + $0x38] sm:$0xff]
      %v240 = vld [vmem:[%s223 + $0x40] sm:$0xff]
      %v241 = vld [vmem:[%s223 + $0x48] sm:$0xff]
      %v242 = vld [vmem:[%s223 + $0x50] sm:$0xff]
      %v243 = vld [vmem:[%s223 + $0x58] sm:$0xff]
      %v244 = vld [vmem:[%s223 + $0x60] sm:$0xff]
      %v245 = vld [vmem:[%s223 + $0x68] sm:$0xff]
      %v246 = vld [vmem:[%s223 + $0x70] sm:$0xff]
      %v247 = vld [vmem:[%s223 + $0x78] sm:$0xff]
      %v248 = vld [vmem:[%s223 + $0x80] sm:$0xff]
      %v249 = vld [vmem:[%s223 + $0x88] sm:$0xff]
      %v250 = vld [vmem:[%s223 + $0x90] sm:$0xff]
      %v251 = vld [vmem:[%s223 + $0x98] sm:$0xff]
      %v252 = vld [vmem:[%s223 + $0xa0] sm:$0xff]
      %v253 = vld [vmem:[%s223 + $0xa8] sm:$0xff]
      %v254 = vld [vmem:[%s223 + $0xb0] sm:$0xff]
      %v255 = vld [vmem:[%s223 + $0xb8] sm:$0xff]
      %v256 = vld [vmem:[%s223 + $0xc0] sm:$0xff]
      %v257 = vld [vmem:[%s223 + $0xc8] sm:$0xff]
      %v258 = vld [vmem:[%s223 + $0xd0] sm:$0xff]
      %v259 = vld [vmem:[%s223 + $0xd8] sm:$0xff]
      %v260 = vld [vmem:[%s223 + $0xe0] sm:$0xff]
      %v261 = vld [vmem:[%s223 + $0xe8] sm:$0xff]
      %v262 = vld [vmem:[%s223 + $0xf0] sm:$0xff]
      %v263 = vld [vmem:[%s223 + $0xf8] sm:$0xff]
      %v264 = vld [vmem:[%s1] sm:$0xf]
      %v265 = vld [vmem:[%s1 + $0x4] sm:$0xf]
      %v266 = vld [vmem:[%s1 + $0x8] sm:$0xf]
      %v267 = vld [vmem:[%s1 + $0xc] sm:$0xf]
      %v268 = vld [vmem:[%s1 + $0x10] sm:$0xf]
      %v269 = vld [vmem:[%s1 + $0x14] sm:$0xf]
      %v270 = vld [vmem:[%s1 + $0x18] sm:$0xf]
      %v271 = vld [vmem:[%s1 + $0x1c] sm:$0xf]
      %v272 = vld [vmem:[%s1 + $0x20] sm:$0xf]
      %v273 = vld [vmem:[%s1 + $0x24] sm:$0xf]
      %v274 = vld [vmem:[%s1 + $0x28] sm:$0xf]
      %v275 = vld [vmem:[%s1 + $0x2c] sm:$0xf]
      %v276 = vld [vmem:[%s1 + $0x30] sm:$0xf]
      %v277 = vld [vmem:[%s1 + $0x34] sm:$0xf]
      %v278 = vld [vmem:[%s1 + $0x38] sm:$0xf]
      %v279 = vld [vmem:[%s1 + $0x3c] sm:$0xf]
      %v280 = vld [vmem:[%s1 + $0x40] sm:$0xf]
      %v281 = vld [vmem:[%s1 + $0x44] sm:$0xf]
      %v282 = vld [vmem:[%s1 + $0x48] sm:$0xf]
      %v283 = vld [vmem:[%s1 + $0x4c] sm:$0xf]
      %v284 = vld [vmem:[%s1 + $0x50] sm:$0xf]
      %v285 = vld [vmem:[%s1 + $0x54] sm:$0xf]
      %v286 = vld [vmem:[%s1 + $0x58] sm:$0xf]
      %v287 = vld [vmem:[%s1 + $0x5c] sm:$0xf]
      %v288 = vld [vmem:[%s1 + $0x60] sm:$0xf]
      %v289 = vld [vmem:[%s1 + $0x64] sm:$0xf]
      %v290 = vld [vmem:[%s1 + $0x68] sm:$0xf]
      %v291 = vld [vmem:[%s1 + $0x6c] sm:$0xf]
      %v292 = vld [vmem:[%s1 + $0x70] sm:$0xf]
      %v293 = vld [vmem:[%s1 + $0x74] sm:$0xf]
      %v294 = vld [vmem:[%s1 + $0x78] sm:$0xf]
      %v295 = vld [vmem:[%s1 + $0x7c] sm:$0xf]
      %v296 = vld [vmem:[%s2] sm:$0x1]
      %v298 = vlaneseq
      %v299 = vshrl.u32 %v298, 7
      %v300 = vsub.s32 0, %v299
      %v301 = vrot.slane %v296, %v300
      %v335 = vunpack.c.l.b16 %v232
      %v336 = vunpack.c.h.b16 %v232
      %v337 = vunpack.c.l.b16 %v233
      %v338 = vunpack.c.h.b16 %v233
      %v339 = vunpack.c.l.b16 %v234
      %v340 = vunpack.c.h.b16 %v234
      %v341 = vunpack.c.l.b16 %v235
      %v342 = vunpack.c.h.b16 %v235
      %v343 = vunpack.c.l.b16 %v236
      %v344 = vunpack.c.h.b16 %v236
      %v345 = vunpack.c.l.b16 %v237
      %v346 = vunpack.c.h.b16 %v237
      %v347 = vunpack.c.l.b16 %v238
      %v348 = vunpack.c.h.b16 %v238
      %v349 = vunpack.c.l.b16 %v239
      %v350 = vunpack.c.h.b16 %v239
      %v351 = vunpack.c.l.b16 %v240
      %v352 = vunpack.c.h.b16 %v240
      %v353 = vunpack.c.l.b16 %v241
      %v354 = vunpack.c.h.b16 %v241
      %v355 = vunpack.c.l.b16 %v242
      %v356 = vunpack.c.h.b16 %v242
      %v357 = vunpack.c.l.b16 %v243
      %v358 = vunpack.c.h.b16 %v243
      %v359 = vunpack.c.l.b16 %v244
      %v360 = vunpack.c.h.b16 %v244
      %v361 = vunpack.c.l.b16 %v245
      %v362 = vunpack.c.h.b16 %v245
      %v363 = vunpack.c.l.b16 %v246
      %v364 = vunpack.c.h.b16 %v246
      %v365 = vunpack.c.l.b16 %v247
      %v366 = vunpack.c.h.b16 %v247
      %v367 = vunpack.c.l.b16 %v248
      %v368 = vunpack.c.h.b16 %v248
      %v369 = vunpack.c.l.b16 %v249
      %v370 = vunpack.c.h.b16 %v249
      %v371 = vunpack.c.l.b16 %v250
      %v372 = vunpack.c.h.b16 %v250
      %v373 = vunpack.c.l.b16 %v251
      %v374 = vunpack.c.h.b16 %v251
      %v375 = vunpack.c.l.b16 %v252
      %v376 = vunpack.c.h.b16 %v252
      %v377 = vunpack.c.l.b16 %v253
      %v378 = vunpack.c.h.b16 %v253
      %v379 = vunpack.c.l.b16 %v254
      %v380 = vunpack.c.h.b16 %v254
      %v381 = vunpack.c.l.b16 %v255
      %v382 = vunpack.c.h.b16 %v255
      %v383 = vunpack.c.l.b16 %v256
      %v384 = vunpack.c.h.b16 %v256
      %v385 = vunpack.c.l.b16 %v257
      %v386 = vunpack.c.h.b16 %v257
      %v387 = vunpack.c.l.b16 %v258
      %v388 = vunpack.c.h.b16 %v258
      %v389 = vunpack.c.l.b16 %v259
      %v390 = vunpack.c.h.b16 %v259
      %v391 = vunpack.c.l.b16 %v260
      %v392 = vunpack.c.h.b16 %v260
      %v393 = vunpack.c.l.b16 %v261
      %v394 = vunpack.c.h.b16 %v261
      %v395 = vunpack.c.l.b16 %v262
      %v396 = vunpack.c.h.b16 %v262
      %v397 = vunpack.c.l.b16 %v263
      %v398 = vunpack.c.h.b16 %v263
      %v399 = vpack.c.b16 %v337, %v335
      %v400 = vpack.c.b16 %v338, %v336
      %v401 = vpack.c.b16 %v341, %v339
      %v402 = vpack.c.b16 %v342, %v340
      %v403 = vpack.c.b16 %v345, %v343
      %v404 = vpack.c.b16 %v346, %v344
      %v405 = vpack.c.b16 %v349, %v347
      %v406 = vpack.c.b16 %v350, %v348
      %v407 = vpack.c.b16 %v353, %v351
      %v408 = vpack.c.b16 %v354, %v352
      %v409 = vpack.c.b16 %v357, %v355
      %v410 = vpack.c.b16 %v358, %v356
      %v411 = vpack.c.b16 %v361, %v359
      %v412 = vpack.c.b16 %v362, %v360
      %v413 = vpack.c.b16 %v365, %v363
      %v414 = vpack.c.b16 %v366, %v364
      %v415 = vpack.c.b16 %v369, %v367
      %v416 = vpack.c.b16 %v370, %v368
      %v417 = vpack.c.b16 %v373, %v371
      %v418 = vpack.c.b16 %v374, %v372
      %v419 = vpack.c.b16 %v377, %v375
      %v420 = vpack.c.b16 %v378, %v376
      %v421 = vpack.c.b16 %v381, %v379
      %v422 = vpack.c.b16 %v382, %v380
      %v423 = vpack.c.b16 %v385, %v383
      %v424 = vpack.c.b16 %v386, %v384
      %v425 = vpack.c.b16 %v389, %v387
      %v426 = vpack.c.b16 %v390, %v388
      %v427 = vpack.c.b16 %v393, %v391
      %v428 = vpack.c.b16 %v394, %v392
      %v429 = vpack.c.b16 %v397, %v395
      %v430 = vpack.c.b16 %v398, %v396
      %v495 = vunpack.c.l.b16 %v264
      %v496 = vunpack.c.l.b16 %v265
      %v497 = vunpack.c.l.b16 %v266
      %v498 = vunpack.c.l.b16 %v267
      %v499 = vunpack.c.l.b16 %v268
      %v500 = vunpack.c.l.b16 %v269
      %v501 = vunpack.c.l.b16 %v270
      %v502 = vunpack.c.l.b16 %v271
      %v503 = vunpack.c.l.b16 %v272
      %v504 = vunpack.c.l.b16 %v273
      %v505 = vunpack.c.l.b16 %v274
      %v506 = vunpack.c.l.b16 %v275
      %v507 = vunpack.c.l.b16 %v276
      %v508 = vunpack.c.l.b16 %v277
      %v509 = vunpack.c.l.b16 %v278
      %v510 = vunpack.c.l.b16 %v279
      %v511 = vunpack.c.l.b16 %v280
      %v512 = vunpack.c.l.b16 %v281
      %v513 = vunpack.c.l.b16 %v282
      %v514 = vunpack.c.l.b16 %v283
      %v515 = vunpack.c.l.b16 %v284
      %v516 = vunpack.c.l.b16 %v285
      %v517 = vunpack.c.l.b16 %v286
      %v518 = vunpack.c.l.b16 %v287
      %v519 = vunpack.c.l.b16 %v288
      %v520 = vunpack.c.l.b16 %v289
      %v521 = vunpack.c.l.b16 %v290
      %v522 = vunpack.c.l.b16 %v291
      %v523 = vunpack.c.l.b16 %v292
      %v524 = vunpack.c.l.b16 %v293
      %v525 = vunpack.c.l.b16 %v294
      %v526 = vunpack.c.l.b16 %v295
      %v527 = vpack.c.b16 %v496, %v495
      %v528 = vpack.c.b16 %v498, %v497
      %v529 = vpack.c.b16 %v500, %v499
      %v530 = vpack.c.b16 %v502, %v501
      %v531 = vpack.c.b16 %v504, %v503
      %v532 = vpack.c.b16 %v506, %v505
      %v533 = vpack.c.b16 %v508, %v507
      %v534 = vpack.c.b16 %v510, %v509
      %v535 = vpack.c.b16 %v512, %v511
      %v536 = vpack.c.b16 %v514, %v513
      %v537 = vpack.c.b16 %v516, %v515
      %v538 = vpack.c.b16 %v518, %v517
      %v539 = vpack.c.b16 %v520, %v519
      %v540 = vpack.c.b16 %v522, %v521
      %v541 = vpack.c.b16 %v524, %v523
      %v542 = vpack.c.b16 %v526, %v525
      %559 = vmatprep.subr.bf16.mxu0 0
      %560 = vmatpush1.bf16.msra.mxu0 %v534
      %561 = vmatprep.subr.bf16.mxu0 0
      %562 = vmatpush1.bf16.msra.mxu0 %v533
      %563 = vmatprep.subr.bf16.mxu0 0
      %564 = vmatpush1.bf16.msra.mxu0 %v532
      %565 = vmatprep.subr.bf16.mxu0 0
      %566 = vmatpush1.bf16.msra.mxu0 %v531
      %567 = vmatprep.subr.bf16.mxu0 0
      %568 = vmatpush1.bf16.msra.mxu0 %v530
      %569 = vmatprep.subr.bf16.mxu0 0
      %570 = vmatpush1.bf16.msra.mxu0 %v529
      %571 = vmatprep.subr.bf16.mxu0 0
      %572 = vmatpush1.bf16.msra.mxu0 %v528
      %573 = vmatprep.subr.bf16.mxu0 0
      %574 = vmatpush1.bf16.msra.mxu0 %v527
      %575 = vmatprep.subr.bf16.mxu0 0
      %576 = vmatpush2.bf16.msra.mxu0 %v542
      %577 = vmatprep.subr.bf16.mxu0 0
      %578 = vmatpush2.bf16.msra.mxu0 %v541
      %579 = vmatprep.subr.bf16.mxu0 0
      %580 = vmatpush2.bf16.msra.mxu0 %v540
      %581 = vmatprep.subr.bf16.mxu0 0
      %582 = vmatpush2.bf16.msra.mxu0 %v539
      %583 = vmatprep.subr.bf16.mxu0 0
      %584 = vmatpush2.bf16.msra.mxu0 %v538
      %585 = vmatprep.subr.bf16.mxu0 0
      %586 = vmatpush2.bf16.msra.mxu0 %v537
      %587 = vmatprep.subr.bf16.mxu0 0
      %588 = vmatpush2.bf16.msra.mxu0 %v536
      %589 = vmatprep.subr.bf16.mxu0 0
      %590 = vmatpush2.bf16.msra.mxu0 %v535
      %591 = vmatprep.mubr.bf16.mxu0 %v400
      %592 = vmatmul.mubr.bf16.gmra.mxu0 %v399
      %v593 = vpop.f32.mrf.mxu0
      %v594 = vadd.f32 %v301, %v593
      %v595 = vpop.f32.mrf.mxu0
      %v596 = vpop.f32.mrf.mxu0
      %v597 = vadd.f32 %v301, %v596
      %v598 = vpop.f32.mrf.mxu0
      %599 = vmatprep.mubr.bf16.mxu0 %v402
      %600 = vmatmul.mubr.bf16.gmra.mxu0 %v401
      %v601 = vpop.f32.mrf.mxu0
      %v602 = vadd.f32 %v301, %v601
      %v603 = vpop.f32.mrf.mxu0
      %v604 = vpop.f32.mrf.mxu0
      %v605 = vadd.f32 %v301, %v604
      %v606 = vpop.f32.mrf.mxu0
      %607 = vmatprep.mubr.bf16.mxu0 %v404
      %608 = vmatmul.mubr.bf16.gmra.mxu0 %v403
      %v609 = vpop.f32.mrf.mxu0
      %v610 = vadd.f32 %v301, %v609
      %v611 = vpop.f32.mrf.mxu0
      %v612 = vpop.f32.mrf.mxu0
      %v613 = vadd.f32 %v301, %v612
      %v614 = vpop.f32.mrf.mxu0
      %615 = vmatprep.mubr.bf16.mxu0 %v406
      %616 = vmatmul.mubr.bf16.gmra.mxu0 %v405
      %v617 = vpop.f32.mrf.mxu0
      %v618 = vadd.f32 %v301, %v617
      %v619 = vpop.f32.mrf.mxu0
      %v620 = vpop.f32.mrf.mxu0
      %v621 = vadd.f32 %v301, %v620
      %v622 = vpop.f32.mrf.mxu0
      %623 = vmatprep.mubr.bf16.mxu0 %v408
      %624 = vmatmul.mubr.bf16.gmra.mxu0 %v407
      %v625 = vpop.f32.mrf.mxu0
      %v626 = vadd.f32 %v301, %v625
      %v627 = vpop.f32.mrf.mxu0
      %v628 = vpop.f32.mrf.mxu0
      %v629 = vadd.f32 %v301, %v628
      %v630 = vpop.f32.mrf.mxu0
      %631 = vmatprep.mubr.bf16.mxu0 %v410
      %632 = vmatmul.mubr.bf16.gmra.mxu0 %v409
      %v633 = vpop.f32.mrf.mxu0
      %v634 = vadd.f32 %v301, %v633
      %v635 = vpop.f32.mrf.mxu0
      %v636 = vpop.f32.mrf.mxu0
      %v637 = vadd.f32 %v301, %v636
      %v638 = vpop.f32.mrf.mxu0
      %639 = vmatprep.mubr.bf16.mxu0 %v412
      %640 = vmatmul.mubr.bf16.gmra.mxu0 %v411
      %v641 = vpop.f32.mrf.mxu0
      %v642 = vadd.f32 %v301, %v641
      %v643 = vpop.f32.mrf.mxu0
      %v644 = vpop.f32.mrf.mxu0
      %v645 = vadd.f32 %v301, %v644
      %v646 = vpop.f32.mrf.mxu0
      %647 = vmatprep.mubr.bf16.mxu0 %v414
      %648 = vmatmul.mubr.bf16.gmra.mxu0 %v413
      %v649 = vpop.f32.mrf.mxu0
      %v650 = vadd.f32 %v301, %v649
      %v651 = vpop.f32.mrf.mxu0
      %v652 = vpop.f32.mrf.mxu0
      %v653 = vadd.f32 %v301, %v652
      %v654 = vpop.f32.mrf.mxu0
      %655 = vmatprep.mubr.bf16.mxu0 %v416
      %656 = vmatmul.mubr.bf16.gmra.mxu0 %v415
      %v657 = vpop.f32.mrf.mxu0
      %v658 = vadd.f32 %v301, %v657
      %v659 = vpop.f32.mrf.mxu0
      %v660 = vpop.f32.mrf.mxu0
      %v661 = vadd.f32 %v301, %v660
      %v662 = vpop.f32.mrf.mxu0
      %663 = vmatprep.mubr.bf16.mxu0 %v418
      %664 = vmatmul.mubr.bf16.gmra.mxu0 %v417
      %v665 = vpop.f32.mrf.mxu0
      %v666 = vadd.f32 %v301, %v665
      %v667 = vpop.f32.mrf.mxu0
      %v668 = vpop.f32.mrf.mxu0
      %v669 = vadd.f32 %v301, %v668
      %v670 = vpop.f32.mrf.mxu0
      %671 = vmatprep.mubr.bf16.mxu0 %v420
      %672 = vmatmul.mubr.bf16.gmra.mxu0 %v419
      %v673 = vpop.f32.mrf.mxu0
      %v674 = vadd.f32 %v301, %v673
      %v675 = vpop.f32.mrf.mxu0
      %v676 = vpop.f32.mrf.mxu0
      %v677 = vadd.f32 %v301, %v676
      %v678 = vpop.f32.mrf.mxu0
      %679 = vmatprep.mubr.bf16.mxu0 %v422
      %680 = vmatmul.mubr.bf16.gmra.mxu0 %v421
      %v681 = vpop.f32.mrf.mxu0
      %v682 = vadd.f32 %v301, %v681
      %v683 = vpop.f32.mrf.mxu0
      %v684 = vpop.f32.mrf.mxu0
      %v685 = vadd.f32 %v301, %v684
      %v686 = vpop.f32.mrf.mxu0
      %687 = vmatprep.mubr.bf16.mxu0 %v424
      %688 = vmatmul.mubr.bf16.gmra.mxu0 %v423
      %v689 = vpop.f32.mrf.mxu0
      %v690 = vadd.f32 %v301, %v689
      %v691 = vpop.f32.mrf.mxu0
      %v692 = vpop.f32.mrf.mxu0
      %v693 = vadd.f32 %v301, %v692
      %v694 = vpop.f32.mrf.mxu0
      %695 = vmatprep.mubr.bf16.mxu0 %v426
      %696 = vmatmul.mubr.bf16.gmra.mxu0 %v425
      %v697 = vpop.f32.mrf.mxu0
      %v698 = vadd.f32 %v301, %v697
      %v699 = vpop.f32.mrf.mxu0
      %v700 = vpop.f32.mrf.mxu0
      %v701 = vadd.f32 %v301, %v700
      %v702 = vpop.f32.mrf.mxu0
      %703 = vmatprep.mubr.bf16.mxu0 %v428
      %704 = vmatmul.mubr.bf16.gmra.mxu0 %v427
      %v705 = vpop.f32.mrf.mxu0
      %v706 = vadd.f32 %v301, %v705
      %v707 = vpop.f32.mrf.mxu0
      %v708 = vpop.f32.mrf.mxu0
      %v709 = vadd.f32 %v301, %v708
      %v710 = vpop.f32.mrf.mxu0
      %711 = vmatprep.mubr.bf16.mxu0 %v430
      %712 = vmatmul.mubr.bf16.gmra.mxu0 %v429
      %v713 = vpop.f32.mrf.mxu0
      %v714 = vadd.f32 %v301, %v713
      %v715 = vpop.f32.mrf.mxu0
      %v716 = vpop.f32.mrf.mxu0
      %v717 = vadd.f32 %v301, %v716
      %v718 = vpop.f32.mrf.mxu0
      %719 = vdwg.mxu0
      %v720 = vmax.f32 %v594, 0.0
      %v721 = vmax.f32 %v597, 0.0
      %v722 = vmax.f32 %v602, 0.0
      %v723 = vmax.f32 %v605, 0.0
      %v724 = vmax.f32 %v610, 0.0
      %v725 = vmax.f32 %v613, 0.0
      %v726 = vmax.f32 %v618, 0.0
      %v727 = vmax.f32 %v621, 0.0
      %v728 = vmax.f32 %v626, 0.0
      %v729 = vmax.f32 %v629, 0.0
      %v730 = vmax.f32 %v634, 0.0
      %v731 = vmax.f32 %v637, 0.0
      %v732 = vmax.f32 %v642, 0.0
      %v733 = vmax.f32 %v645, 0.0
      %v734 = vmax.f32 %v650, 0.0
      %v735 = vmax.f32 %v653, 0.0
      %v736 = vmax.f32 %v658, 0.0
      %v737 = vmax.f32 %v661, 0.0
      %v738 = vmax.f32 %v666, 0.0
      %v739 = vmax.f32 %v669, 0.0
      %v740 = vmax.f32 %v674, 0.0
      %v741 = vmax.f32 %v677, 0.0
      %v742 = vmax.f32 %v682, 0.0
      %v743 = vmax.f32 %v685, 0.0
      %v744 = vmax.f32 %v690, 0.0
      %v745 = vmax.f32 %v693, 0.0
      %v746 = vmax.f32 %v698, 0.0
      %v747 = vmax.f32 %v701, 0.0
      %v748 = vmax.f32 %v706, 0.0
      %v749 = vmax.f32 %v709, 0.0
      %v750 = vmax.f32 %v714, 0.0
      %v751 = vmax.f32 %v717, 0.0
      %v752 = vpack.c.bf16 %v721, %v720
      %v753 = vpack.c.bf16 %v723, %v722
      %v754 = vpack.c.bf16 %v725, %v724
      %v755 = vpack.c.bf16 %v727, %v726
      %v756 = vpack.c.bf16 %v729, %v728
      %v757 = vpack.c.bf16 %v731, %v730
      %v758 = vpack.c.bf16 %v733, %v732
      %v759 = vpack.c.bf16 %v735, %v734
      %v760 = vpack.c.bf16 %v737, %v736
      %v761 = vpack.c.bf16 %v739, %v738
      %v762 = vpack.c.bf16 %v741, %v740
      %v763 = vpack.c.bf16 %v743, %v742
      %v764 = vpack.c.bf16 %v745, %v744
      %v765 = vpack.c.bf16 %v747, %v746
      %v766 = vpack.c.bf16 %v749, %v748
      %v767 = vpack.c.bf16 %v751, %v750
      %v768 = vld [vmem:[%s3] sm:$0xf]
      %v769 = vld [vmem:[%s3 + $0x4] sm:$0xf]
      %v770 = vld [vmem:[%s3 + $0x8] sm:$0xf]
      %v771 = vld [vmem:[%s3 + $0xc] sm:$0xf]
      %v772 = vld [vmem:[%s3 + $0x10] sm:$0xf]
      %v773 = vld [vmem:[%s3 + $0x14] sm:$0xf]
      %v774 = vld [vmem:[%s3 + $0x18] sm:$0xf]
      %v775 = vld [vmem:[%s3 + $0x1c] sm:$0xf]
      %v776 = vld [vmem:[%s3 + $0x20] sm:$0xf]
      %v777 = vld [vmem:[%s3 + $0x24] sm:$0xf]
      %v778 = vld [vmem:[%s3 + $0x28] sm:$0xf]
      %v779 = vld [vmem:[%s3 + $0x2c] sm:$0xf]
      %v780 = vld [vmem:[%s3 + $0x30] sm:$0xf]
      %v781 = vld [vmem:[%s3 + $0x34] sm:$0xf]
      %v782 = vld [vmem:[%s3 + $0x38] sm:$0xf]
      %v783 = vld [vmem:[%s3 + $0x3c] sm:$0xf]
      %v784 = vld [vmem:[%s4] sm:$0x1]
      %v786 = vlaneseq
      %v787 = vshrl.u32 %v786, 7
      %v788 = vsub.s32 0, %v787
      %v789 = vrot.slane %v784, %v788
      %v807 = vunpack.c.l.b16 %v768
      %v808 = vunpack.c.l.b16 %v769
      %v809 = vunpack.c.l.b16 %v770
      %v810 = vunpack.c.l.b16 %v771
      %v811 = vunpack.c.l.b16 %v772
      %v812 = vunpack.c.l.b16 %v773
      %v813 = vunpack.c.l.b16 %v774
      %v814 = vunpack.c.l.b16 %v775
      %v815 = vunpack.c.l.b16 %v776
      %v816 = vunpack.c.l.b16 %v777
      %v817 = vunpack.c.l.b16 %v778
      %v818 = vunpack.c.l.b16 %v779
      %v819 = vunpack.c.l.b16 %v780
      %v820 = vunpack.c.l.b16 %v781
      %v821 = vunpack.c.l.b16 %v782
      %v822 = vunpack.c.l.b16 %v783
      %v823 = vpack.c.b16 %v808, %v807
      %v824 = vpack.c.b16 %v810, %v809
      %v825 = vpack.c.b16 %v812, %v811
      %v826 = vpack.c.b16 %v814, %v813
      %v827 = vpack.c.b16 %v816, %v815
      %v828 = vpack.c.b16 %v818, %v817
      %v829 = vpack.c.b16 %v820, %v819
      %v830 = vpack.c.b16 %v822, %v821
      %839 = vmatprep.subr.bf16.mxu0 0
      %840 = vmatpush1.bf16.msra.mxu0 %v830
      %841 = vmatprep.subr.bf16.mxu0 0
      %842 = vmatpush1.bf16.msra.mxu0 %v829
      %843 = vmatprep.subr.bf16.mxu0 0
      %844 = vmatpush1.bf16.msra.mxu0 %v828
      %845 = vmatprep.subr.bf16.mxu0 0
      %846 = vmatpush1.bf16.msra.mxu0 %v827
      %847 = vmatprep.subr.bf16.mxu0 0
      %848 = vmatpush1.bf16.msra.mxu0 %v826
      %849 = vmatprep.subr.bf16.mxu0 0
      %850 = vmatpush1.bf16.msra.mxu0 %v825
      %851 = vmatprep.subr.bf16.mxu0 0
      %852 = vmatpush1.bf16.msra.mxu0 %v824
      %853 = vmatprep.subr.bf16.mxu0 0
      %854 = vmatpush1.bf16.msra.mxu0 %v823
      %855 = vmatprep.subr.bf16.mxu0 0
      %856 = vmatpush2.bf16.msra.mxu0 0
      %857 = vmatprep.subr.bf16.mxu0 0
      %858 = vmatpush2.bf16.msra.mxu0 0
      %859 = vmatprep.subr.bf16.mxu0 0
      %860 = vmatpush2.bf16.msra.mxu0 0
      %861 = vmatprep.subr.bf16.mxu0 0
      %862 = vmatpush2.bf16.msra.mxu0 0
      %863 = vmatprep.subr.bf16.mxu0 0
      %864 = vmatpush2.bf16.msra.mxu0 0
      %865 = vmatprep.subr.bf16.mxu0 0
      %866 = vmatpush2.bf16.msra.mxu0 0
      %867 = vmatprep.subr.bf16.mxu0 0
      %868 = vmatpush2.bf16.msra.mxu0 0
      %869 = vmatprep.subr.bf16.mxu0 0
      %870 = vmatpush2.bf16.msra.mxu0 0
      %871 = vmatprep.mubr.bf16.mxu0 0
      %872 = vmatmul.mubr.bf16.gmra.mxu0 %v752
      %v873 = vpop.f32.mrf.mxu0
      %v874 = vadd.f32 %v789, %v873
      %v875 = vpop.f32.mrf.mxu0
      %v876 = vpop.f32.mrf.mxu0
      %v877 = vadd.f32 %v789, %v876
      %v878 = vpop.f32.mrf.mxu0
      %879 = vmatprep.mubr.bf16.mxu0 0
      %880 = vmatmul.mubr.bf16.gmra.mxu0 %v753
      %v881 = vpop.f32.mrf.mxu0
      %v882 = vadd.f32 %v789, %v881
      %v883 = vpop.f32.mrf.mxu0
      %v884 = vpop.f32.mrf.mxu0
      %v885 = vadd.f32 %v789, %v884
      %v886 = vpop.f32.mrf.mxu0
      %887 = vmatprep.mubr.bf16.mxu0 0
      %888 = vmatmul.mubr.bf16.gmra.mxu0 %v754
      %v889 = vpop.f32.mrf.mxu0
      %v890 = vadd.f32 %v789, %v889
      %v891 = vpop.f32.mrf.mxu0
      %v892 = vpop.f32.mrf.mxu0
      %v893 = vadd.f32 %v789, %v892
      %v894 = vpop.f32.mrf.mxu0
      %895 = vmatprep.mubr.bf16.mxu0 0
      %896 = vmatmul.mubr.bf16.gmra.mxu0 %v755
      %v897 = vpop.f32.mrf.mxu0
      %v898 = vadd.f32 %v789, %v897
      %v899 = vpop.f32.mrf.mxu0
      %v900 = vpop.f32.mrf.mxu0
      %v901 = vadd.f32 %v789, %v900
      %v902 = vpop.f32.mrf.mxu0
      %903 = vmatprep.mubr.bf16.mxu0 0
      %904 = vmatmul.mubr.bf16.gmra.mxu0 %v756
      %v905 = vpop.f32.mrf.mxu0
      %v906 = vadd.f32 %v789, %v905
      %v907 = vpop.f32.mrf.mxu0
      %v908 = vpop.f32.mrf.mxu0
      %v909 = vadd.f32 %v789, %v908
      %v910 = vpop.f32.mrf.mxu0
      %911 = vmatprep.mubr.bf16.mxu0 0
      %912 = vmatmul.mubr.bf16.gmra.mxu0 %v757
      %v913 = vpop.f32.mrf.mxu0
      %v914 = vadd.f32 %v789, %v913
      %v915 = vpop.f32.mrf.mxu0
      %v916 = vpop.f32.mrf.mxu0
      %v917 = vadd.f32 %v789, %v916
      %v918 = vpop.f32.mrf.mxu0
      %919 = vmatprep.mubr.bf16.mxu0 0
      %920 = vmatmul.mubr.bf16.gmra.mxu0 %v758
      %v921 = vpop.f32.mrf.mxu0
      %v922 = vadd.f32 %v789, %v921
      %v923 = vpop.f32.mrf.mxu0
      %v924 = vpop.f32.mrf.mxu0
      %v925 = vadd.f32 %v789, %v924
      %v926 = vpop.f32.mrf.mxu0
      %927 = vmatprep.mubr.bf16.mxu0 0
      %928 = vmatmul.mubr.bf16.gmra.mxu0 %v759
      %v929 = vpop.f32.mrf.mxu0
      %v930 = vadd.f32 %v789, %v929
      %v931 = vpop.f32.mrf.mxu0
      %v932 = vpop.f32.mrf.mxu0
      %v933 = vadd.f32 %v789, %v932
      %v934 = vpop.f32.mrf.mxu0
      %935 = vmatprep.mubr.bf16.mxu0 0
      %936 = vmatmul.mubr.bf16.gmra.mxu0 %v760
      %v937 = vpop.f32.mrf.mxu0
      %v938 = vadd.f32 %v789, %v937
      %v939 = vpop.f32.mrf.mxu0
      %v940 = vpop.f32.mrf.mxu0
      %v941 = vadd.f32 %v789, %v940
      %v942 = vpop.f32.mrf.mxu0
      %943 = vmatprep.mubr.bf16.mxu0 0
      %944 = vmatmul.mubr.bf16.gmra.mxu0 %v761
      %v945 = vpop.f32.mrf.mxu0
      %v946 = vadd.f32 %v789, %v945
      %v947 = vpop.f32.mrf.mxu0
      %v948 = vpop.f32.mrf.mxu0
      %v949 = vadd.f32 %v789, %v948
      %v950 = vpop.f32.mrf.mxu0
      %951 = vmatprep.mubr.bf16.mxu0 0
      %952 = vmatmul.mubr.bf16.gmra.mxu0 %v762
      %v953 = vpop.f32.mrf.mxu0
      %v954 = vadd.f32 %v789, %v953
      %v955 = vpop.f32.mrf.mxu0
      %v956 = vpop.f32.mrf.mxu0
      %v957 = vadd.f32 %v789, %v956
      %v958 = vpop.f32.mrf.mxu0
      %959 = vmatprep.mubr.bf16.mxu0 0
      %960 = vmatmul.mubr.bf16.gmra.mxu0 %v763
      %v961 = vpop.f32.mrf.mxu0
      %v962 = vadd.f32 %v789, %v961
      %v963 = vpop.f32.mrf.mxu0
      %v964 = vpop.f32.mrf.mxu0
      %v965 = vadd.f32 %v789, %v964
      %v966 = vpop.f32.mrf.mxu0
      %967 = vmatprep.mubr.bf16.mxu0 0
      %968 = vmatmul.mubr.bf16.gmra.mxu0 %v764
      %v969 = vpop.f32.mrf.mxu0
      %v970 = vadd.f32 %v789, %v969
      %v971 = vpop.f32.mrf.mxu0
      %v972 = vpop.f32.mrf.mxu0
      %v973 = vadd.f32 %v789, %v972
      %v974 = vpop.f32.mrf.mxu0
      %975 = vmatprep.mubr.bf16.mxu0 0
      %976 = vmatmul.mubr.bf16.gmra.mxu0 %v765
      %v977 = vpop.f32.mrf.mxu0
      %v978 = vadd.f32 %v789, %v977
      %v979 = vpop.f32.mrf.mxu0
      %v980 = vpop.f32.mrf.mxu0
      %v981 = vadd.f32 %v789, %v980
      %v982 = vpop.f32.mrf.mxu0
      %983 = vmatprep.mubr.bf16.mxu0 0
      %984 = vmatmul.mubr.bf16.gmra.mxu0 %v766
      %v985 = vpop.f32.mrf.mxu0
      %v986 = vadd.f32 %v789, %v985
      %v987 = vpop.f32.mrf.mxu0
      %v988 = vpop.f32.mrf.mxu0
      %v989 = vadd.f32 %v789, %v988
      %v990 = vpop.f32.mrf.mxu0
      %991 = vmatprep.mubr.bf16.mxu0 0
      %992 = vmatmul.mubr.bf16.gmra.mxu0 %v767
      %v993 = vpop.f32.mrf.mxu0
      %v994 = vadd.f32 %v789, %v993
      %v995 = vpop.f32.mrf.mxu0
      %v996 = vpop.f32.mrf.mxu0
      %v997 = vadd.f32 %v789, %v996
      %v998 = vpop.f32.mrf.mxu0
      %999 = vdwg.mxu0
      %1000 = vst [vmem:[%s229] sm:$0xff] %v874
      %1001 = vst [vmem:[%s229 + $0x8] sm:$0xff] %v877
      %1002 = vst [vmem:[%s229 + $0x10] sm:$0xff] %v882
      %1003 = vst [vmem:[%s229 + $0x18] sm:$0xff] %v885
      %1004 = vst [vmem:[%s229 + $0x20] sm:$0xff] %v890
      %1005 = vst [vmem:[%s229 + $0x28] sm:$0xff] %v893
      %1006 = vst [vmem:[%s229 + $0x30] sm:$0xff] %v898
      %1007 = vst [vmem:[%s229 + $0x38] sm:$0xff] %v901
      %1008 = vst [vmem:[%s229 + $0x40] sm:$0xff] %v906
      %1009 = vst [vmem:[%s229 + $0x48] sm:$0xff] %v909
      %1010 = vst [vmem:[%s229 + $0x50] sm:$0xff] %v914
      %1011 = vst [vmem:[%s229 + $0x58] sm:$0xff] %v917
      %1012 = vst [vmem:[%s229 + $0x60] sm:$0xff] %v922
      %1013 = vst [vmem:[%s229 + $0x68] sm:$0xff] %v925
      %1014 = vst [vmem:[%s229 + $0x70] sm:$0xff] %v930
      %1015 = vst [vmem:[%s229 + $0x78] sm:$0xff] %v933
      %1016 = vst [vmem:[%s229 + $0x80] sm:$0xff] %v938
      %1017 = vst [vmem:[%s229 + $0x88] sm:$0xff] %v941
      %1018 = vst [vmem:[%s229 + $0x90] sm:$0xff] %v946
      %1019 = vst [vmem:[%s229 + $0x98] sm:$0xff] %v949
      %1020 = vst [vmem:[%s229 + $0xa0] sm:$0xff] %v954
      %1021 = vst [vmem:[%s229 + $0xa8] sm:$0xff] %v957
      %1022 = vst [vmem:[%s229 + $0xb0] sm:$0xff] %v962
      %1023 = vst [vmem:[%s229 + $0xb8] sm:$0xff] %v965
      %1024 = vst [vmem:[%s229 + $0xc0] sm:$0xff] %v970
      %1025 = vst [vmem:[%s229 + $0xc8] sm:$0xff] %v973
      %1026 = vst [vmem:[%s229 + $0xd0] sm:$0xff] %v978
      %1027 = vst [vmem:[%s229 + $0xd8] sm:$0xff] %v981
      %1028 = vst [vmem:[%s229 + $0xe0] sm:$0xff] %v986
      %1029 = vst [vmem:[%s229 + $0xe8] sm:$0xff] %v989
      %1030 = vst [vmem:[%s229 + $0xf0] sm:$0xff] %v994
      %1031 = vst [vmem:[%s229 + $0xf8] sm:$0xff] %v997
      %s1032 = smul.u32 32, %s16
      %p1033 = scmp.lt.s32.totalorder %s1032, 63
      %s1034 = scalar_select %p1033, %s1032, 63
      %s1035 = smul.addr %s1034, 8
      %s1036 = scalar_lea.vmem %s5, %s1035
      // Predicated region
      $region41: #{linear_net_forward.1} parent=39 // pred_check
        %p1037 = pneg %p144
      $region42: #{linear_net_forward.1} parent=39 // pred_check_branch
        %1039 = sbr.rel (%p1037) target = $region44
      $region43: #{linear_net_forward.1} parent=39 // pred_region
        %s1040 = smul.u32 32, %s16
      $region44: #{linear_net_forward.1} parent=39 // pred_fallthru
        _
    $region40: #{linear_net_forward.1} parent=5 // pred_fallthru
      _
    %p1041 = scmp.le.s32.totalorder 2, %s11
    // Predicated region
    $region45: #{linear_net_forward.1} parent=5 // pred_check
      %p1042 = pneg %p1041
    $region46: #{linear_net_forward.1} parent=5 // pred_check_branch
      %1044 = sbr.rel (%p1042) target = $region48
    $region47: #{linear_net_forward.1} parent=5 // pred_region
      %s1045 = ssub.s32 %s11, 2
      // Predicated region
      $region49: #{linear_net_forward.1} parent=47 // pred_check
        %p1046 = pneg %p150
      $region50: #{linear_net_forward.1} parent=47 // pred_check_branch
        %1048 = sbr.rel (%p1046) target = $region52
      $region51: #{linear_net_forward.1} parent=47 // pred_region
        %s1049 = smul.u32 32, %s17
        %p1050 = scmp.lt.s32.totalorder %s1049, 63
        %s1051 = scalar_select %p1050, %s1049, 63
        %s1052 = smul.addr %s1051, 8
        %s1053 = scalar_lea.vmem %s5, %s1052
      $region52: #{linear_net_forward.1} parent=47 // pred_fallthru
        _
    $region48: #{linear_net_forward.1} parent=5 // pred_fallthru
      _
  $region6: #{linear_net_forward.1} parent=0 // loop_footer
    %s15 = sadd.s32 1, %s11
  $region7: #{linear_net_forward.1} parent=0 // loop_footer_branch
    %10 = sbr.rel target = $region3
  $region8: #{linear_net_forward.1} parent=0 // loop_exit
    _

</llo_original>
